<compile_context>
chip_gen: v7x
topology: tpu7x:2x2x1
jax: 0.10.0
libtpu: 0.0.40
codegen_flags: <defaults>
</compile_context>

<pallas_src>
import functools
import math

import jax
import jax.numpy as jnp
from jax.experimental import pallas as pl
from jax.experimental.pallas import tpu as pltpu


# --------------------------------------------------------------------------- #
# VMEM budget / tile selection                                                #
# --------------------------------------------------------------------------- #
def _vmem_budget_bytes():
    """Scoped-VMEM budget to request per pallas_call (generation aware)."""
    cap = 64 << 20                       # conservative default (v7x physical VMEM)
    try:
        info = pltpu.get_tpu_info()
        cap = int(getattr(info, "vmem_capacity_bytes", cap))
    except Exception:
        pass
    # Leave headroom for compiler-internal scratch; never ask for more than 96 MiB.
    return int(min((cap * 3) // 4, 96 << 20))


def _pick_hw_tile(C, HW, itemsize, target_bytes, override=None):
    """Lane tile: a multiple of 128, or the full HW extent (always legal)."""
    if override is not None:
        thw = max(128, (int(override) // 128) * 128)
        return HW if thw >= HW else thw
    if C * HW * itemsize <= target_bytes:
        return HW                                     # single full-extent block
    thw = max(128, ((target_bytes // itemsize) // max(C, 1)) // 128 * 128)
    return HW if thw >= HW else thw


# --------------------------------------------------------------------------- #
# Channel conv helpers                                                        #
# --------------------------------------------------------------------------- #
def _channel_conv_sublane(y, w_ref, k):
    """k-tap 1-D conv over the channel (sublane) axis of a (C,1) f32 column,
    zero-padded at both ends; taps are scalars read from SMEM.
    TODO(synk): assumes odd k (the ECA kernel-size rule guarantees this)."""
    C = y.shape[0]
    pad = (k - 1) // 2
    out = jnp.zeros_like(y)
    for j in range(k):                   # k is a small static int (3 / 5 / 7)
        d = j - pad
        if d == 0:
            sh = y
        elif d > 0:
            sh = jnp.concatenate([y[d:, :], jnp.zeros((d, 1), jnp.float32)], axis=0)
        else:
            sh = jnp.concatenate([jnp.zeros((-d, 1), jnp.float32), y[:C + d, :]], axis=0)
        out = out + w_ref[j] * sh
    return out


def _channel_conv_gate(pooled_bc, w):
    """Tiny wrapper-side epilogue for Path B: conv over channels + sigmoid."""
    k = int(w.shape[0])
    pad = (k - 1) // 2
    C = pooled_bc.shape[1]
    yp = jnp.pad(pooled_bc, ((0, 0), (pad, pad)))
    yc = jnp.zeros_like(pooled_bc)
    for j in range(k):
        yc = yc + w[j] * jax.lax.slice_in_dim(yp, j, j + C, axis=1)
    return jax.nn.sigmoid(yc)


# --------------------------------------------------------------------------- #
# Path A: fused single-pass kernel (pool + conv + sigmoid + gate)             #
# --------------------------------------------------------------------------- #
def _fused_eca_kernel(w_ref, x_ref, o_ref, *, inv_hw, k_taps):
    # w_ref: (k,) SMEM taps; x_ref / o_ref: (1, C, HW) full per-batch slab.
    xb = x_ref[0]                                                       # (C, HW)
    y = jnp.sum(xb, axis=-1, keepdims=True, dtype=jnp.float32) * inv_hw  # (C, 1)
    gate = jax.nn.sigmoid(_channel_conv_sublane(y, w_ref, k_taps))      # (C, 1) f32
    # Multiply in the input dtype (keeps bf16 VALU work halved on v6e/v7x).
    o_ref[0] = (xb * gate.astype(xb.dtype)).astype(o_ref.dtype)


# --------------------------------------------------------------------------- #
# Path B kernel 1: partial pooled sums, per (batch, HW-chunk)                 #
# --------------------------------------------------------------------------- #
def _pool_partial_kernel(x_ref, psum_ref, acc_ref, *, hw, thw, tiles_per_chunk,
                         need_mask):
    # x_ref: (1, C, thw); psum_ref: (1, 1, C, 1); acc_ref: (C, 1) f32 scratch.
    c = pl.program_id(1)
    t = pl.program_id(2)

    @pl.when(t == 0)
    def _():
        acc_ref[...] = jnp.zeros_like(acc_ref)

    xb = x_ref[0]                                            # (C, thw)
    if need_mask:
        # Global lane offset of this tile (un-clamped) -> zero ragged / phantom lanes.
        base = (c * tiles_per_chunk + t) * thw
        lane = jax.lax.broadcasted_iota(jnp.int32, xb.shape, 1)
        xb = jnp.where(base + lane < hw, xb, jnp.zeros((), xb.dtype))
    acc_ref[...] += jnp.sum(xb, axis=-1, keepdims=True, dtype=jnp.float32)

    @pl.when(t == pl.num_programs(2) - 1)
    def _():
        psum_ref[0, 0] = acc_ref[...]


# --------------------------------------------------------------------------- #
# Path B kernel 2: lane-dense gating sweep                                    #
# --------------------------------------------------------------------------- #
def _apply_gate_kernel(gate_ref, x_ref, o_ref):
    # gate_ref: (1, C, 1) f32; x_ref / o_ref: (1, C, thw).
    xb = x_ref[0]
    o_ref[0] = (xb * gate_ref[0].astype(xb.dtype)).astype(o_ref.dtype)


# --------------------------------------------------------------------------- #
# Wrapper                                                                     #
# --------------------------------------------------------------------------- #
def eca_layer(x_nchw, conv_w, *, hw_tile=None, force_two_pass=False):
    """x_nchw: (B, C, H, W); conv_w: (k,) Conv1d weight (no bias). Returns (B, C, H, W)."""
    B, C, H, W = x_nchw.shape
    HW = H * W
    k = int(conv_w.reshape(-1).shape[0])
    itemsize = jnp.dtype(x_nchw.dtype).itemsize

    budget = _vmem_budget_bytes()
    x_flat = x_nchw.reshape(B, C, HW)          # trailing-dim merge: free, no HBM pass
    w = conv_w.reshape(-1).astype(jnp.float32)

    # ---------------- Path A: fused single pass (1R + 1W of x) ----------------
    slab_bytes = C * HW * itemsize
    fused_limit = (budget - (4 << 20)) // 4    # 2 in + 2 out double-buffered slabs
    if not force_two_pass and slab_bytes <= fused_limit:
        out_flat = pl.pallas_call(
            functools.partial(_fused_eca_kernel, inv_hw=1.0 / HW, k_taps=k),
            out_shape=jax.ShapeDtypeStruct((B, C, HW), x_nchw.dtype),
            grid_spec=pltpu.PrefetchScalarGridSpec(
                num_scalar_prefetch=0,
                grid=(B,),
                in_specs=[
                    pl.BlockSpec(memory_space=pltpu.MemorySpace.SMEM),   # (k,) taps
                    pl.BlockSpec((1, C, HW), lambda b: (b, 0, 0)),
                ],
                out_specs=pl.BlockSpec((1, C, HW), lambda b: (b, 0, 0)),
            ),
            compiler_params=pltpu.CompilerParams(
                dimension_semantics=("parallel",),
                vmem_limit_bytes=budget),
        )(w, x_flat)
        return out_flat.reshape(B, C, H, W)

    # ---------------- Path B: two-pass (big per-batch slabs) ----------------
    # Kernel 1: partial pooled sums. Only the input is double-buffered -> big tiles.
    thw1 = _pick_hw_tile(C, HW, itemsize, min(16 << 20, (budget - (8 << 20)) // 2),
                         override=hw_tile)
    n_hw1 = pl.cdiv(HW, thw1)
    # Split the pooling read across 2 chunks when B alone can't feed both v7x cores.
    n_chunks = 2 if (B % 2 == 1 and n_hw1 >= 2) else 1
    tpc = pl.cdiv(n_hw1, n_chunks)
    need_mask = (HW % thw1 != 0) or (n_chunks * tpc != n_hw1)

    psum = pl.pallas_call(
        functools.partial(_pool_partial_kernel, hw=HW, thw=thw1,
                          tiles_per_chunk=tpc, need_mask=need_mask),
        out_shape=jax.ShapeDtypeStruct((B, n_chunks, C, 1), jnp.float32),
        grid_spec=pltpu.PrefetchScalarGridSpec(
            num_scalar_prefetch=0,
            grid=(B, n_chunks, tpc),
            in_specs=[
                pl.BlockSpec(
                    (1, C, thw1),
                    # Clamp phantom tiles of the last chunk onto a valid block;
                    # the in-kernel lane mask zeroes their contribution.
                    lambda b, c, t: (b, 0, jnp.minimum(c * tpc + t, n_hw1 - 1))),
            ],
            out_specs=pl.BlockSpec((1, 1, C, 1), lambda b, c, t: (b, c, 0, 0)),
            scratch_shapes=[pltpu.VMEM((C, 1), jnp.float32)],
        ),
        compiler_params=pltpu.CompilerParams(
            dimension_semantics=("parallel", "parallel", "arbitrary"),
            vmem_limit_bytes=budget),
    )(x_flat)

    # Tiny epilogue on (B, C): combine chunk partials, mean, conv, sigmoid.
    pooled = jnp.sum(psum[..., 0], axis=1) * (1.0 / HW)         # (B, C)
    gate = _channel_conv_gate(pooled, w).reshape(B, C, 1)       # (B, C, 1) f32

    # Kernel 2: gating sweep. in + out double-buffered -> ~8 MiB tiles.
    thw2 = _pick_hw_tile(C, HW, itemsize, min(8 << 20, (budget - (8 << 20)) // 4),
                         override=hw_tile)
    n_hw2 = pl.cdiv(HW, thw2)
    # NOTE: input_output_aliases={1: 0} would drop the extra HBM output allocation
    # when the caller no longer needs x; left off so x stays valid for callers.
    out_flat = pl.pallas_call(
        _apply_gate_kernel,
        out_shape=jax.ShapeDtypeStruct((B, C, HW), x_nchw.dtype),
        grid_spec=pltpu.PrefetchScalarGridSpec(
            num_scalar_prefetch=0,
            grid=(B, n_hw2),
            in_specs=[
                pl.BlockSpec((1, C, 1), lambda b, t: (b, 0, 0)),      # gate
                pl.BlockSpec((1, C, thw2), lambda b, t: (b, 0, t)),   # x tile
            ],
            out_specs=pl.BlockSpec((1, C, thw2), lambda b, t: (b, 0, t)),
        ),
        compiler_params=pltpu.CompilerParams(
            dimension_semantics=("parallel", "parallel"),
            vmem_limit_bytes=budget),
    )(gate, x_flat)

    return out_flat.reshape(B, C, H, W)


# --------------------------------------------------------------------------- #
# Pure-JAX reference of the PyTorch forward                                   #
# --------------------------------------------------------------------------- #
def _make_band_matrix(conv_w, channels):
    k = conv_w.shape[0]
    pad = (k - 1) // 2
    idx = jnp.arange(channels)
    diff = idx[None, :] - idx[:, None] + pad
    inside = (diff >= 0) & (diff < k)
    gathered = conv_w[jnp.clip(diff, 0, k - 1)]
    return jnp.where(inside, gathered, 0.0).astype(jnp.float32)


def eca_reference(x_nchw, conv_w):
    B, C, H, W = x_nchw.shape
    y = jnp.mean(x_nchw.astype(jnp.float32), axis=(2, 3))      # (B, C)
    band = _make_band_matrix(conv_w, C)
    yc = jnp.einsum("cd,bd->bc", band, y)                       # conv over channels
    gate = jax.nn.sigmoid(yc)[:, :, None, None]
    return (x_nchw * gate).astype(x_nchw.dtype)


if __name__ == "__main__":
    # channels=16 -> ECA rule gives conv kernel size k=3 (as in the module).
    B, C, H, W = 2, 16, 18, 15       # H*W = 270: exercises the ragged (non-128) edge
    gamma, b_ = 2, 1
    t = int(abs((math.log(C, 2) + b_) / gamma))
    k = t if t % 2 else t + 1        # = 3 for C=16

    key = jax.random.PRNGKey(0)
    kx, kw = jax.random.split(key)
    x = jax.random.normal(kx, (B, C, H, W), dtype=jnp.float32)
    # Conv1d weight is (out=1, in=1, k) in torch -> flatten to (k,)
    conv_w = jax.random.normal(kw, (k,), dtype=jnp.float32) * (1.0 / math.sqrt(k))

    ref = eca_reference(x, conv_w)

    # Path A: fused single-pass (per-batch slab easily fits in VMEM).
    out = jax.block_until_ready(eca_layer(x, conv_w))
    assert out.shape == x.shape and out.dtype == x.dtype
    assert jnp.allclose(out, ref, atol=1e-5, rtol=1e-5), "mismatch (fused path)"

    # Path B: two-pass with full-extent tiles (no ragged masking needed).
    out2 = jax.block_until_ready(eca_layer(x, conv_w, force_two_pass=True))
    assert jnp.allclose(out2, ref, atol=1e-5, rtol=1e-5), "mismatch (two-pass, full tile)"

    # Path B with forced 128-lane tiles: multi-tile accumulation + ragged lane mask.
    out3 = jax.block_until_ready(eca_layer(x, conv_w, force_two_pass=True, hw_tile=128))
    assert jnp.allclose(out3, ref, atol=1e-5, rtol=1e-5), "mismatch (two-pass, hw_tile=128)"

    # Path B with B=1: exercises the dual-chunk ("parallel" HW split) pooling path,
    # including a phantom (clamped + fully-masked) edge tile.
    out4 = jax.block_until_ready(eca_layer(x[:1], conv_w, force_two_pass=True, hw_tile=128))
    assert jnp.allclose(out4, ref[:1], atol=1e-5, rtol=1e-5), "mismatch (two-pass, B=1 chunks)"

    print("KERNEL_OK")
</pallas_src>

<mosaic_0001>
module attributes {stable_mosaic.version = 11 : i64} {
  func.func @_fused_eca_kernel(%arg0: i32, %arg1: memref<3xf32, #tpu.memory_space<smem>>, %arg2: memref<1x16x270xf32, #tpu.memory_space<vmem>>, %arg3: memref<1x16x270xf32, #tpu.memory_space<vmem>>) attributes {dimension_semantics = [#tpu.dimension_semantics<parallel>], iteration_bounds = array<i64: 2>, scalar_prefetch = 0 : i64, scratch_operands = 0 : i64, tpu.core_type = #tpu.core_type<tc>, window_params = [{transform_indices = @transform_0, window_bounds = array<i64: 3>}, {transform_indices = @transform_1, window_bounds = array<i64: 1, 16, 270>}, {transform_indices = @transform_2, window_bounds = array<i64: 1, 16, 270>}]} {
    %c0 = arith.constant 0 : index
    %c0_0 = arith.constant 0 : index
    %c0_1 = arith.constant 0 : index
    %0 = vector.load %arg2[%c0, %c0_0, %c0_1] : memref<1x16x270xf32, #tpu.memory_space<vmem>>, vector<1x16x270xf32>
    %1 = vector.shape_cast %0 : vector<1x16x270xf32> to vector<16x270xf32>
    %cst = arith.constant dense<0.000000e+00> : vector<16xf32>
    %2 = vector.multi_reduction <add>, %1, %cst [1] : vector<16x270xf32> to vector<16xf32>
    %3 = vector.shape_cast %2 : vector<16xf32> to vector<16x1xf32>
    %cst_2 = arith.constant 0.00370370364 : f32
    %4 = vector.broadcast %cst_2 : f32 to vector<16x1xf32>
    %5 = arith.mulf %3, %4 : vector<16x1xf32>
    %cst_3 = arith.constant 0.000000e+00 : f32
    %6 = vector.broadcast %cst_3 : f32 to vector<16x1xf32>
    %cst_4 = arith.constant 0.000000e+00 : f32
    %7 = vector.broadcast %cst_4 : f32 to vector<1x1xf32>
    %8 = vector.extract_strided_slice %5 {offsets = [0, 0], sizes = [15, 1], strides = [1, 1]} : vector<16x1xf32> to vector<15x1xf32>
    %9 = tpu.concatenate %7, %8 in 0 : vector<1x1xf32>, vector<15x1xf32> -> vector<16x1xf32>
    %c0_5 = arith.constant 0 : index
    %10 = memref.load %arg1[%c0_5] : memref<3xf32, #tpu.memory_space<smem>>
    %11 = vector.broadcast %10 : f32 to vector<16x1xf32>
    %12 = arith.mulf %11, %9 : vector<16x1xf32>
    %13 = arith.addf %6, %12 : vector<16x1xf32>
    %c1 = arith.constant 1 : index
    %14 = memref.load %arg1[%c1] : memref<3xf32, #tpu.memory_space<smem>>
    %15 = vector.broadcast %14 : f32 to vector<16x1xf32>
    %16 = arith.mulf %15, %5 : vector<16x1xf32>
    %17 = arith.addf %13, %16 : vector<16x1xf32>
    %18 = vector.extract_strided_slice %5 {offsets = [1, 0], sizes = [15, 1], strides = [1, 1]} : vector<16x1xf32> to vector<15x1xf32>
    %cst_6 = arith.constant 0.000000e+00 : f32
    %19 = vector.broadcast %cst_6 : f32 to vector<1x1xf32>
    %20 = tpu.concatenate %18, %19 in 0 : vector<15x1xf32>, vector<1x1xf32> -> vector<16x1xf32>
    %c2 = arith.constant 2 : index
    %21 = memref.load %arg1[%c2] : memref<3xf32, #tpu.memory_space<smem>>
    %22 = vector.broadcast %21 : f32 to vector<16x1xf32>
    %23 = arith.mulf %22, %20 : vector<16x1xf32>
    %24 = arith.addf %17, %23 : vector<16x1xf32>
    %25 = arith.negf %24 : vector<16x1xf32>
    %26 = math.exp %25 : vector<16x1xf32>
    %cst_7 = arith.constant 1.000000e+00 : f32
    %27 = vector.broadcast %cst_7 : f32 to vector<16x1xf32>
    %28 = arith.addf %27, %26 : vector<16x1xf32>
    %29 = arith.divf %27, %28 : vector<16x1xf32>
    %30 = vector.broadcast %29 : vector<16x1xf32> to vector<16x270xf32>
    %31 = arith.mulf %1, %30 : vector<16x270xf32>
    %c0_8 = arith.constant 0 : index
    %c0_9 = arith.constant 0 : index
    %c0_10 = arith.constant 0 : index
    %32 = vector.load %arg3[%c0_8, %c0_9, %c0_10] : memref<1x16x270xf32, #tpu.memory_space<vmem>>, vector<1x16x270xf32>
    %33 = vector.shape_cast %32 : vector<1x16x270xf32> to vector<16x270xf32>
    %34 = vector.shape_cast %31 : vector<16x270xf32> to vector<1x16x270xf32>
    tpu.vector_store %arg3[%c0_8, %c0_9, %c0_10], %34 {strides = array<i32>} : memref<1x16x270xf32, #tpu.memory_space<vmem>>, vector<1x16x270xf32>,
    return
  }
  func.func @transform_0(%arg0: i32) -> i32 {
    %c0_i32 = arith.constant 0 : i32
    %c0_i32_0 = arith.constant 0 : i32
    return %c0_i32 : i32
  }
  func.func @transform_1(%arg0: i32) -> (i32, i32, i32) {
    %c0_i32 = arith.constant 0 : i32
    %c0_i32_0 = arith.constant 0 : i32
    %c0_i32_1 = arith.constant 0 : i32
    return %arg0, %c0_i32, %c0_i32_0 : i32, i32, i32
  }
  func.func @transform_2(%arg0: i32) -> (i32, i32, i32) {
    %c0_i32 = arith.constant 0 : i32
    %c0_i32_0 = arith.constant 0 : i32
    %c0_i32_1 = arith.constant 0 : i32
    return %arg0, %c0_i32, %c0_i32_0 : i32, i32, i32
  }
}

</mosaic_0001>

<llo_original>
// kernel: tpu_custom_call.1
$region0: #{tpu_custom_call.1}
  #allocation0 [shape = 'u32[]', space=smem, size = 0x4, offset = 0x4, fixed_abs, tag = 'smem constant byte address 0x4 - core index']
  #allocation1 [shape = 'u32[144,128]{1,0:T(1,128)}', space=vmem, size = 0x12000, scoped, tag = 'internal scratch']
  %s0 = inlined_call_operand.hbm [shape: f32[3], index: 0, kind: input, shape index: {}]
  %s1 = inlined_call_operand.hbm [shape: f32[2,16,270], index: 1, kind: input, shape index: {}]
  %s2 = inlined_call_operand.hbm [shape: f32[2,16,270], index: 2, kind: output, shape index: {}]
  %s3 = sld [smem:[#allocation0]]
  $region49: #{tpu_custom_call.1} parent=0
    _
  %s5 = ssub.s32 1, %s3
  %s6 = scalar_select 0, %s5, %s3
  $region1: #{tpu_custom_call.1} parent=0
    #allocation2 [shape = 'u8[512]{0}', space=smem, size = 0x200, scoped, tag = 'input window, operand 0, single buffered']
    #allocation3 [shape = 's32[2]{0}', space=sflag, size = 0x8, scoped, tag = 'scoped memory for tpu_custom_call.1']
    #allocation4 [shape = 's32[2]{0}', space=sflag, size = 0x8, scoped, tag = 'scoped memory for tpu_custom_call.1']
    #allocation5 [shape = 's32[2]{0}', space=sflag, size = 0x8, scoped, tag = 'scoped memory for tpu_custom_call.1']
    #allocation6 [shape = 'u8[49152]{0}', space=vmem, size = 0xc000, scoped, tag = 'input window, operand 1']
    #allocation7 [shape = 'u8[49152]{0}', space=vmem, size = 0xc000, scoped, tag = 'output window, operand 0']
    %7 = vsyncpa [#allocation5], 0
    %8 = vsyncpa [#allocation3], 0
    %s9 = scalar_lea.sflag [#allocation3], 1
    %10 = vsyncpa %s9, 0
    %11 = vsyncpa [#allocation4], 0
    %s12 = scalar_lea.sflag [#allocation4], 1
    %13 = vsyncpa %s12, 0
    loop: start=0, step=1, limit=4
    $region2: #{tpu_custom_call.1} parent=1 // loop_pre_header
      _
    $region3: #{tpu_custom_call.1} parent=1 // loop_header
      %s15 = sphi 0, %s19
      %p16 = scmp.ge.s32.totalorder %s15, 4
      %s23 = sphi 0, %s23
      %s25 = sphi 0, %s23
      %s26 = sphi 0, %s25
      %s40 = sphi 0, %s26
      %s46 = sphi 0, %s48
      %s49 = sphi 0, %s46
      %s50 = sphi 0, %s49
      %s66 = sphi 0, %s50
      %s72 = sphi 0, %s74
      %s75 = sphi 0, %s72
      %s76 = sphi 0, %s75
      %s92 = sphi 0, %s76
    $region4: #{tpu_custom_call.1} parent=1 // loop_header_branch
      %18 = sbr.rel (%p16) target = $region8
    $region5: #{tpu_custom_call.1} parent=1 // loop_body
      %s20 = ssub.s32 %s15, 1
      %s21 = ssub.s32 %s15, 2
      %s22 = sadd.s32 %s15, 1
      %s24 = sadd.s32 %s23, 1
      %p27 = scmp.eq.s32.totalorder %s15, 1
      %p28 = scmp.ne.s32.totalorder %s23, %s25
      %p29 = scmp.eq.s32.totalorder %s15, 0
      %p30 = por %p28, %p29
      %p31 = scmp.ne.s32.totalorder %s23, %s25
      %p32 = scmp.eq.s32.totalorder %s20, 1
      %p33 = por %p31, %p32
      %p34 = scmp.ne.s32.totalorder %s25, %s26
      %p35 = scmp.eq.s32.totalorder %s20, 0
      %p36 = por %p34, %p35
      %p37 = scmp.ne.s32.totalorder %s25, %s26
      %p38 = scmp.eq.s32.totalorder %s21, 1
      %p39 = por %p37, %p38
      %p41 = scmp.ne.s32.totalorder %s26, %s40
      %p42 = scmp.eq.s32.totalorder %s21, 0
      %p43 = por %p41, %p42
      %s44 = ssub.s32 %s15, %s22
      %p45 = scmp.eq.s32.totalorder %s44, 0
      %s47 = sadd.s32 %s46, 1
      %s48 = scalar_select %p45, %s46, %s47
      %p51 = pneg %p45
      %p52 = scmp.eq.s32.totalorder %s15, 1
      %p53 = por %p51, %p52
      %p54 = scmp.ne.s32.totalorder %s46, %s49
      %p55 = scmp.eq.s32.totalorder %s15, 0
      %p56 = por %p54, %p55
      %p57 = scmp.ne.s32.totalorder %s46, %s49
      %p58 = scmp.eq.s32.totalorder %s20, 1
      %p59 = por %p57, %p58
      %p60 = scmp.ne.s32.totalorder %s49, %s50
      %p61 = scmp.eq.s32.totalorder %s20, 0
      %p62 = por %p60, %p61
      %p63 = scmp.ne.s32.totalorder %s49, %s50
      %p64 = scmp.eq.s32.totalorder %s21, 1
      %p65 = por %p63, %p64
      %p67 = scmp.ne.s32.totalorder %s50, %s66
      %p68 = scmp.eq.s32.totalorder %s21, 0
      %p69 = por %p67, %p68
      %s70 = ssub.s32 %s15, %s22
      %p71 = scmp.eq.s32.totalorder %s70, 0
      %s73 = sadd.s32 %s72, 1
      %s74 = scalar_select %p71, %s72, %s73
      %p77 = pneg %p71
      %p78 = scmp.eq.s32.totalorder %s15, 1
      %p79 = por %p77, %p78
      %p80 = scmp.ne.s32.totalorder %s72, %s75
      %p81 = scmp.eq.s32.totalorder %s15, 0
      %p82 = por %p80, %p81
      %p83 = scmp.ne.s32.totalorder %s72, %s75
      %p84 = scmp.eq.s32.totalorder %s20, 1
      %p85 = por %p83, %p84
      %p86 = scmp.ne.s32.totalorder %s75, %s76
      %p87 = scmp.eq.s32.totalorder %s20, 0
      %p88 = por %p86, %p87
      %p89 = scmp.ne.s32.totalorder %s75, %s76
      %p90 = scmp.eq.s32.totalorder %s21, 1
      %p91 = por %p89, %p90
      %p93 = scmp.ne.s32.totalorder %s76, %s92
      %p94 = scmp.eq.s32.totalorder %s21, 0
      %p95 = por %p93, %p94
      %p96 = scmp.le.s32.totalorder 1, %s15
      %p97 = scmp.lt.s32.totalorder %s15, 3
      %p98 = pnand %p96, %p97
      %p99 = pneg %p98
      // Predicated region
      $region9: #{tpu_custom_call.1} parent=5 // pred_check
        _
      $region10: #{tpu_custom_call.1} parent=5 // pred_check_branch
        %101 = sbr.rel (%p98) target = $region12
      $region11: #{tpu_custom_call.1} parent=5 // pred_region
        %s102 = ssub.s32 %s15, 1
        // Predicated region
        $region13: #{tpu_custom_call.1} parent=11 // pred_check
          %p103 = pneg %p36
        $region14: #{tpu_custom_call.1} parent=11 // pred_check_branch
          %105 = sbr.rel (%p103) target = $region16
        $region15: #{tpu_custom_call.1} parent=11 // pred_region
          %s107 = ssub.s32 16, 16
          %108 = vsyncadd [#allocation5], %s107
          %111 = dma.hbm_to_smem %s0, 16, [#allocation2], [#allocation5]
        $region16: #{tpu_custom_call.1} parent=11 // pred_fallthru
          _
      $region12: #{tpu_custom_call.1} parent=5 // pred_fallthru
        _
      %p112 = scmp.lt.s32.totalorder %s15, 2
      // Predicated region
      $region17: #{tpu_custom_call.1} parent=5 // pred_check
        %p113 = pneg %p112
      $region18: #{tpu_custom_call.1} parent=5 // pred_check_branch
        %115 = sbr.rel (%p113) target = $region20
      $region19: #{tpu_custom_call.1} parent=5 // pred_region
        // Predicated region
        $region21: #{tpu_custom_call.1} parent=19 // pred_check
          %p116 = pneg %p56
        $region22: #{tpu_custom_call.1} parent=19 // pred_check_branch
          %118 = sbr.rel (%p116) target = $region24
        $region23: #{tpu_custom_call.1} parent=19 // pred_region
          %s119 = sand.u32 %s46, 1
          %s120 = scalar_lea.sflag [#allocation3], %s119
          %s121 = sand.u32 %s46, 1
          %s122 = smul.addr %s121, 48
          %s123 = scalar_lea.vmem [#allocation6], %s122
          %s125 = ssub.s32 768, 768
          %126 = vsyncadd %s120, %s125
          %s127 = smul.addr %s15, 6
          %s128 = smul.addr %s127, 128
          %s129 = scalar_lea.hbm %s1, %s128
          %s130 = sshll.u32 %s123, 4
          %s131 = int_to_ptr.vmem [resolvable:$true] %s130
          %136 = dma.hbm_to_vmem [thread:$0]  %s129, 768, %s131, %s120, 384, 384, 24
        $region24: #{tpu_custom_call.1} parent=19 // pred_fallthru
          _
      $region20: #{tpu_custom_call.1} parent=5 // pred_fallthru
        _
      %p137 = scmp.le.s32.totalorder 1, %s15
      %p138 = scmp.lt.s32.totalorder %s15, 3
      %p139 = pnand %p137, %p138
      %p140 = pneg %p139
      // Predicated region
      $region25: #{tpu_custom_call.1} parent=5 // pred_check
        _
      $region26: #{tpu_custom_call.1} parent=5 // pred_check_branch
        %142 = sbr.rel (%p139) target = $region28
      $region27: #{tpu_custom_call.1} parent=5 // pred_region
        %s143 = ssub.s32 %s15, 1
        // Predicated region
        $region29: #{tpu_custom_call.1} parent=27 // pred_check
          %p144 = pneg %p36
        $region30: #{tpu_custom_call.1} parent=27 // pred_check_branch
          %146 = sbr.rel (%p144) target = $region32
        $region31: #{tpu_custom_call.1} parent=27 // pred_region
          %147 = dma.done [#allocation5], 16
        $region32: #{tpu_custom_call.1} parent=27 // pred_fallthru
          _
        %s148 = sand.u32 %s49, 1
        %s149 = scalar_lea.sflag [#allocation3], %s148
        %s150 = sand.u32 %s49, 1
        %s151 = smul.addr %s150, 48
        %s152 = scalar_lea.vmem [#allocation6], %s151
        // Predicated region
        $region33: #{tpu_custom_call.1} parent=27 // pred_check
          %p153 = pneg %p62
        $region34: #{tpu_custom_call.1} parent=27 // pred_check_branch
          %155 = sbr.rel (%p153) target = $region36
        $region35: #{tpu_custom_call.1} parent=27 // pred_region
          %156 = dma.done %s149, 768
        $region36: #{tpu_custom_call.1} parent=27 // pred_fallthru
          _
        %157 = sfence
        %p158 = pneg %p36
        %p159 = pneg %p33
        %s160 = sand.u32 %s49, 1
        %s161 = scalar_lea.sflag [#allocation3], %s160
        %s162 = sand.u32 %s49, 1
        %s163 = smul.addr %s162, 48
        %s164 = scalar_lea.vmem [#allocation6], %s163
        %p165 = pneg %p62
        %p166 = pneg %p59
        %p167 = pneg %p88
        %p168 = pneg %p85
        %s169 = sand.u32 %s75, 1
        %s170 = scalar_lea.sflag [#allocation4], %s169
        %s171 = sand.u32 %s75, 1
        %s172 = smul.addr %s171, 48
        %s173 = scalar_lea.vmem [#allocation7], %s172
        %v174 = vld [vmem:[%s152] sm:$0xff]
        %v175 = vld [vmem:[%s152 + $0x8] sm:$0xff]
        %v176 = vld [vmem:[%s152 + $0x10] sm:$0xff]
        %v177 = vld [vmem:[%s152 + $0x18] sm:$0xff]
        %v178 = vld [vmem:[%s152 + $0x20] sm:$0xff]
        %v179 = vld [vmem:[%s152 + $0x28] sm:$0xff]
        %v180 = vadd.f32 %v174, %v175
        %vm181 = vcmask 113664
        %v182 = vsel %vm181, %v176, 0.0
        %v183 = vadd.f32 %v180, %v182
        %184 = vadd.xlane.f32.xlu0 %v183
        %v185 = vpop.xlane.xlu0 %184
        %v186 = vadd.f32 %v177, %v178
        %v187 = vsel %vm181, %v179, 0.0
        %v188 = vadd.f32 %v186, %v187
        %189 = vadd.xlane.f32.xlu0 %v188
        %v190 = vpop.xlane.xlu0 %189
        %v191 = vmul.f32 %v185, 0.0037037036
        %v192 = vmul.f32 %v190, 0.0037037036
        %vm195 = vcmask 1040384
        %v196 = vrot.slane %v191, 7
        %v197 = vrot.slane %v192, 7
        %v198 = vsel %vm195, %v196, %v197
        %v201 = vsel %vm195, 0.0, %v196
        %s202 = sld [smem:[#allocation2]]
        %v203 = vstv %s202
        %v204 = vmul.f32 %v203, %v201
        %v205 = vmul.f32 %v203, %v198
        %v206 = vadd.f32 %v204, 0.0
        %v207 = vadd.f32 %v205, 0.0
        %s208 = sld [smem:[#allocation2 + $0x1]]
        %v209 = vstv %s208
        %v210 = vmul.f32 %v209, %v191
        %v211 = vmul.f32 %v209, %v192
        %v212 = vadd.f32 %v206, %v210
        %v213 = vadd.f32 %v207, %v211
        %vm214 = vcmask 1046528
        %v215 = vrot.slane %v191, 1
        %v216 = vrot.slane %v192, 1
        %v217 = vsel %vm214, %v215, %v216
        %v220 = vsel %vm214, %v216, 0.0
        %s221 = sld [smem:[#allocation2 + $0x2]]
        %v222 = vstv %s221
        %v223 = vmul.f32 %v222, %v217
        %v224 = vmul.f32 %v222, %v220
        %v225 = vadd.f32 %v212, %v223
        %v226 = vadd.f32 %v213, %v224
        %v227 = vxor.u32 %v225, 2147483648
        %v228 = vxor.u32 %v226, 2147483648
        %v229 = vmul.f32 %v227, 1.442695
        %v230 = vpow.pop %v229
        %v231 = vmul.f32 %v228, 1.442695
        %v232 = vpow.pop %v231
        %v233 = vadd.f32 %v230, 1.0
        %v234 = vadd.f32 %v232, 1.0
        %v235 = vrcp.pop %v233
        %v236 = vmul.f32 1.0, %v235
        %v237 = vrcp.pop %v234
        %v238 = vmul.f32 1.0, %v237
        %240 = vset.pattern.permute.xlu0 0
        %241 = vperm.xlu0 %240, %v236
        %v242 = vpop.permute.xlu0 %241
        %245 = vset.pattern.permute.xlu0 0
        %246 = vperm.xlu0 %245, %v238
        %v247 = vpop.permute.xlu0 %246
        %v249 = vmul.f32 %v174, %v242
        %v250 = vmul.f32 %v175, %v242
        %v251 = vmul.f32 %v176, %v242
        %v252 = vmul.f32 %v177, %v247
        %v253 = vmul.f32 %v178, %v247
        %v254 = vmul.f32 %v179, %v247
        %255 = vst [vmem:[%s173] sm:$0xff] %v249
        %256 = vst [vmem:[%s173 + $0x8] sm:$0xff] %v250
        %257 = vst.msk [vmem:[%s173 + $0x10] sm:$0xff] %vm181, %v251
        %258 = vst [vmem:[%s173 + $0x18] sm:$0xff] %v252
        %259 = vst [vmem:[%s173 + $0x20] sm:$0xff] %v253
        %260 = vst.msk [vmem:[%s173 + $0x28] sm:$0xff] %vm181, %v254
        %s261 = sand.u32 %s75, 1
        %s262 = scalar_lea.sflag [#allocation4], %s261
        %s263 = sand.u32 %s75, 1
        %s264 = smul.addr %s263, 48
        %s265 = scalar_lea.vmem [#allocation7], %s264
        // Predicated region
        $region37: #{tpu_custom_call.1} parent=27 // pred_check
          %p266 = pneg %p85
        $region38: #{tpu_custom_call.1} parent=27 // pred_check_branch
          %268 = sbr.rel (%p266) target = $region40
        $region39: #{tpu_custom_call.1} parent=27 // pred_region
          %s270 = ssub.s32 768, 768
          %271 = vsyncadd %s262, %s270
          %s272 = smul.addr %s20, 6
          %s273 = smul.addr %s272, 128
          %s274 = scalar_lea.hbm %s2, %s273
          %s275 = sshll.u32 %s265, 4
          %s276 = int_to_ptr.vmem [resolvable:$true] %s275
          %281 = dma.vmem_to_hbm [thread:$0]  %s276, 768, %s274, %s262, 384, 384, 24
        $region40: #{tpu_custom_call.1} parent=27 // pred_fallthru
          _
      $region28: #{tpu_custom_call.1} parent=5 // pred_fallthru
        _
      %p282 = scmp.le.s32.totalorder 2, %s15
      // Predicated region
      $region41: #{tpu_custom_call.1} parent=5 // pred_check
        %p283 = pneg %p282
      $region42: #{tpu_custom_call.1} parent=5 // pred_check_branch
        %285 = sbr.rel (%p283) target = $region44
      $region43: #{tpu_custom_call.1} parent=5 // pred_region
        %s286 = ssub.s32 %s15, 2
        // Predicated region
        $region45: #{tpu_custom_call.1} parent=43 // pred_check
          %p287 = pneg %p91
        $region46: #{tpu_custom_call.1} parent=43 // pred_check_branch
          %289 = sbr.rel (%p287) target = $region48
        $region47: #{tpu_custom_call.1} parent=43 // pred_region
          %s290 = sand.u32 %s76, 1
          %s291 = scalar_lea.sflag [#allocation4], %s290
          %s292 = sand.u32 %s76, 1
          %s293 = smul.addr %s292, 48
          %s294 = scalar_lea.vmem [#allocation7], %s293
          %295 = dma.done %s291, 768
        $region48: #{tpu_custom_call.1} parent=43 // pred_fallthru
          _
      $region44: #{tpu_custom_call.1} parent=5 // pred_fallthru
        _
    $region6: #{tpu_custom_call.1} parent=1 // loop_footer
      %s19 = sadd.s32 1, %s15
    $region7: #{tpu_custom_call.1} parent=1 // loop_footer_branch
      %14 = sbr.rel target = $region3
    $region8: #{tpu_custom_call.1} parent=1 // loop_exit
      _
    %296 = vsyncpa [#allocation3], 1
    %s297 = scalar_lea.sflag [#allocation3], 1
    %298 = vsyncpa %s297, 1
    %299 = vsyncpa [#allocation4], 1
    %s300 = scalar_lea.sflag [#allocation4], 1
    %301 = vsyncpa %s300, 1
    %302 = vsyncpa [#allocation5], 1
    %s303 = scalar_lea.sflag [#allocation5], 1
    %304 = vsyncpa %s303, 1

</llo_original>
